<compile_context>
chip_gen: v7x
topology: tpu7x:2x2x1
jax: 0.10.0
libtpu: 0.0.40
codegen_flags: <defaults>
</compile_context>

<pallas_src>
import math

import jax
import jax.numpy as jnp
from jax.experimental import pallas as pl
from jax.experimental.pallas import tpu as pltpu


def _round_up(x, m):
    return ((x + m - 1) // m) * m


def _make_float_linear_kernel(compute_dtype, precision):
    def kernel(x_ref, w_ref, b_ref, o_ref):
        # x_ref: (tm, tk) input dtype, w_ref: (tk, tn), b_ref: (1, tn) f32,
        # o_ref: (tm, tn) f32 -- resident across the k axis (acts as the
        # accumulator; no separate VMEM scratch needed).
        k = pl.program_id(2)

        @pl.when(k == 0)
        def _():
            # Seed the accumulator with the bias -> no finalize add needed.
            o_ref[...] = jnp.broadcast_to(b_ref[...], o_ref.shape)

        # FloatTransformer: cast the input before applying the Linear.  The
        # cast feeds the MXU operand directly (f32 path), or stays in bf16
        # when the fast bf16-weight path was selected at build time.
        lhs = x_ref[...].astype(compute_dtype)
        o_ref[...] += jnp.dot(
            lhs,
            w_ref[...],
            preferred_element_type=jnp.float32,
            precision=precision,
        )

    return kernel


def make_float_transformer_linear(
    w,
    b,
    *,
    tm=512,
    tn=1024,
    tk=512,
    weight_dtype=jnp.float32,
    precision=jax.lax.Precision.HIGHEST,
    use_xla_for_single_step=False,
):
    """Build the FloatTransformer(Linear) forward function.

    w: (F, hidden)  -- already transposed relative to torch's (hidden, F)
    b: (hidden,)
    Returns a jitted `forward(x)` with x: (..., F), result: (..., hidden) f32.

    The padded / cast weight and bias are materialized ONCE here (hoisted out
    of the per-call path), eliminating the per-forward HBM pass over W.
    """
    feat, hidden = int(w.shape[0]), int(w.shape[1])

    # Adapt N/K tiles to the problem while keeping 128-lane alignment.
    tn = max(128, min(tn, _round_up(hidden, 128)))
    tk = max(128, min(tk, _round_up(feat, 128)))
    h_pad = _round_up(hidden, tn)
    f_pad = _round_up(feat, tk)

    # One-time weight/bias preparation (cast + zero-pad; zeros are inert in
    # the matmul and get sliced off the output).
    w_p = jnp.pad(jnp.asarray(w, weight_dtype),
                  ((0, f_pad - feat), (0, h_pad - hidden)))
    b_p = jnp.pad(jnp.asarray(b, jnp.float32),
                  (0, h_pad - hidden)).reshape(1, h_pad)

    # bf16 weights => bf16 x bf16 -> f32 accumulate fast path (opt-in);
    # f32 weights => exact torch-f32 Linear semantics.
    if weight_dtype == jnp.bfloat16:
        compute_dtype, dot_precision = jnp.bfloat16, None
    else:
        compute_dtype, dot_precision = jnp.float32, precision

    kernel = _make_float_linear_kernel(compute_dtype, dot_precision)

    def forward(x):
        lead = x.shape[:-1]
        assert x.shape[-1] == feat, "feature dim mismatch"
        m = int(math.prod(lead)) if lead else 1
        if m == 0:  # degenerate leading dim guard
            return jnp.zeros((*lead, hidden), jnp.float32)

        # glue: flatten leading dims into rows (layout only, no compute)
        x2 = x.reshape(m, feat)

        # Keep tm a multiple of 16 (bf16 sublane packing; also divisible by 8
        # for f32), capped at the requested tile and the problem size.
        tm_l = max(16, min(tm, _round_up(m, 16)))
        m_pad = _round_up(m, tm_l)

        # v7x megacore: expose >=2 output blocks on the parallel axes when
        # possible, so both TensorCores get work.  Only halve tn while the
        # result stays a 128-multiple divisor of h_pad.
        tn_l = tn
        while ((m_pad // tm_l) * (h_pad // tn_l) < 2
               and tn_l >= 256
               and (tn_l // 2) % 128 == 0
               and h_pad % (tn_l // 2) == 0):
            tn_l //= 2

        grid = (m_pad // tm_l, h_pad // tn_l, f_pad // tk)

        if use_xla_for_single_step and grid == (1, 1, 1):
            # Tiny problem: pallas_call launch + per-step overhead exceeds the
            # matmul cost; plain XLA is faster.  Disabled by default so the
            # kernel path is exercised.
            y = x2.astype(jnp.float32) @ jnp.asarray(w, jnp.float32) + b
            return y.reshape(*lead, hidden).astype(jnp.float32)

        if m_pad != m or f_pad != feat:
            x_p = jnp.pad(x2, ((0, m_pad - m), (0, f_pad - feat)))
        else:
            x_p = x2

        out = pl.pallas_call(
            kernel,
            out_shape=jax.ShapeDtypeStruct((m_pad, h_pad), jnp.float32),
            grid=grid,
            in_specs=[
                pl.BlockSpec((tm_l, tk), lambda i, j, k: (i, k)),
                pl.BlockSpec((tk, tn_l), lambda i, j, k: (k, j)),
                pl.BlockSpec((1, tn_l), lambda i, j, k: (0, j)),
            ],
            out_specs=pl.BlockSpec((tm_l, tn_l), lambda i, j, k: (i, j)),
            compiler_params=pltpu.CompilerParams(
                dimension_semantics=("parallel", "parallel", "arbitrary"),
                vmem_limit_bytes=32 * 1024 * 1024,
            ),
        )(x_p, w_p, b_p)

        return out[:m, :hidden].reshape(*lead, hidden)

    return jax.jit(forward)


if __name__ == "__main__":
    key = jax.random.PRNGKey(0)
    k_x, k_w, k_b = jax.random.split(key, 3)

    # Small shapes: batch=2, seq=8, features=64 -> rows M=16, hidden=32.
    # Input is bf16 so the in-kernel float32 cast (the module's raison
    # d'etre) is actually exercised.
    batch, seq, feat, hidden = 2, 8, 64, 32

    x = jax.random.normal(k_x, (batch, seq, feat), dtype=jnp.float32)
    x = x.astype(jnp.bfloat16)
    # deterministic synthetic Linear params (torch default init ~ 1/sqrt(F))
    lim = 1.0 / math.sqrt(feat)
    w = jax.random.uniform(k_w, (feat, hidden), jnp.float32, -lim, lim)
    b = jax.random.uniform(k_b, (hidden,), jnp.float32, -lim, lim)

    forward = make_float_transformer_linear(w, b)
    y = jax.block_until_ready(forward(x))

    # reference: FloatTransformer(Linear).forward in plain JAX (true f32)
    ref = jnp.dot(x.astype(jnp.float32), w,
                  precision=jax.lax.Precision.HIGHEST) + b

    assert y.shape == (batch, seq, hidden)
    assert y.dtype == jnp.float32
    assert jnp.allclose(y, ref, atol=5e-3, rtol=5e-3), \
        float(jnp.max(jnp.abs(y - ref)))

    # TODO(synk): FloatTransformer.log()/reset() are bookkeeping on the wrapped
    # module and have no kernel equivalent; only forward() is implemented.
    print("KERNEL_OK")
</pallas_src>

<mosaic_0001>
module attributes {stable_mosaic.version = 11 : i64} {
  func.func @kernel(%arg0: i32, %arg1: i32, %arg2: i32, %arg3: memref<16x128xbf16, #tpu.memory_space<vmem>>, %arg4: memref<128x128xf32, #tpu.memory_space<vmem>>, %arg5: memref<1x128xf32, #tpu.memory_space<vmem>>, %arg6: memref<16x128xf32, #tpu.memory_space<vmem>>) attributes {dimension_semantics = [#tpu.dimension_semantics<parallel>, #tpu.dimension_semantics<parallel>, #tpu.dimension_semantics<arbitrary>], iteration_bounds = array<i64: 1, 1, 1>, scalar_prefetch = 0 : i64, scratch_operands = 0 : i64, tpu.core_type = #tpu.core_type<tc>, window_params = [{transform_indices = @transform_0, window_bounds = array<i64: 16, 128>}, {transform_indices = @transform_1, window_bounds = array<i64: 128, 128>}, {transform_indices = @transform_2, window_bounds = array<i64: 1, 128>}, {transform_indices = @transform_3, window_bounds = array<i64: 16, 128>}]} {
    %c0_i32 = arith.constant 0 : i32
    %0 = arith.cmpi eq, %arg2, %c0_i32 : i32
    %1 = arith.extui %0 : i1 to i32
    %c0_i32_0 = arith.constant 0 : i32
    %2 = arith.cmpi ne, %1, %c0_i32_0 : i32
    scf.if %2 {
      %c0_8 = arith.constant 0 : index
      %c0_9 = arith.constant 0 : index
      %10 = vector.load %arg5[%c0_8, %c0_9] : memref<1x128xf32, #tpu.memory_space<vmem>>, vector<1x128xf32>
      %11 = vector.shape_cast %10 : vector<1x128xf32> to vector<1x128xf32>
      %12 = vector.broadcast %11 : vector<1x128xf32> to vector<16x128xf32>
      %c0_10 = arith.constant 0 : index
      %c0_11 = arith.constant 0 : index
      %13 = vector.load %arg6[%c0_10, %c0_11] : memref<16x128xf32, #tpu.memory_space<vmem>>, vector<16x128xf32>
      tpu.vector_store %arg6[%c0_10, %c0_11], %12 {strides = array<i32>} : memref<16x128xf32, #tpu.memory_space<vmem>>, vector<16x128xf32>,
    } else {
    }
    %c0 = arith.constant 0 : index
    %c0_1 = arith.constant 0 : index
    %3 = vector.load %arg3[%c0, %c0_1] : memref<16x128xbf16, #tpu.memory_space<vmem>>, vector<16x128xbf16>
    %4 = arith.extf %3 : vector<16x128xbf16> to vector<16x128xf32>
    %c0_2 = arith.constant 0 : index
    %c0_3 = arith.constant 0 : index
    %5 = vector.load %arg6[%c0_2, %c0_3] : memref<16x128xf32, #tpu.memory_space<vmem>>, vector<16x128xf32>
    %c0_4 = arith.constant 0 : index
    %c0_5 = arith.constant 0 : index
    %6 = vector.load %arg4[%c0_4, %c0_5] : memref<128x128xf32, #tpu.memory_space<vmem>>, vector<128x128xf32>
    %cst = arith.constant dense<0.000000e+00> : vector<16x128xf32>
    %7 = tpu.matmul %4, %6, %cst {dimension_numbers = #tpu.dot_dimension_numbers<[1], [0], [0], [1], [0, 0, 1, 1], [], []>, precision = #tpu.contract_precision<fp32>} : vector<16x128xf32>, vector<128x128xf32>, vector<16x128xf32> -> vector<16x128xf32>
    %8 = arith.addf %5, %7 : vector<16x128xf32>
    %c0_6 = arith.constant 0 : index
    %c0_7 = arith.constant 0 : index
    %9 = vector.load %arg6[%c0_6, %c0_7] : memref<16x128xf32, #tpu.memory_space<vmem>>, vector<16x128xf32>
    tpu.vector_store %arg6[%c0_6, %c0_7], %8 {strides = array<i32>} : memref<16x128xf32, #tpu.memory_space<vmem>>, vector<16x128xf32>,
    return
  }
  func.func @transform_0(%arg0: i32, %arg1: i32, %arg2: i32) -> (i32, i32) {
    %c0_i32 = arith.constant 0 : i32
    return %arg0, %arg2 : i32, i32
  }
  func.func @transform_1(%arg0: i32, %arg1: i32, %arg2: i32) -> (i32, i32) {
    %c0_i32 = arith.constant 0 : i32
    return %arg2, %arg1 : i32, i32
  }
  func.func @transform_2(%arg0: i32, %arg1: i32, %arg2: i32) -> (i32, i32) {
    %c0_i32 = arith.constant 0 : i32
    %c0_i32_0 = arith.constant 0 : i32
    return %c0_i32, %arg1 : i32, i32
  }
  func.func @transform_3(%arg0: i32, %arg1: i32, %arg2: i32) -> (i32, i32) {
    %c0_i32 = arith.constant 0 : i32
    return %arg0, %arg1 : i32, i32
  }
}

</mosaic_0001>

<llo_original>
// kernel: forward.1
$region0: #{forward.1}
  #allocation0 [shape = 'u32[]', space=smem, size = 0x4, offset = 0x4, fixed_abs, tag = 'smem constant byte address 0x4 - core index']
  #allocation1 [shape = 'u32[144,128]{1,0:T(1,128)}', space=vmem, size = 0x12000, scoped, tag = 'internal scratch']
  %s0 = inlined_call_operand.vmem [shape: bf16[16,128], index: 0, kind: input, shape index: {}]
  %s1 = inlined_call_operand.hbm [shape: f32[128,128], index: 1, kind: input, shape index: {}]
  %s2 = inlined_call_operand.vmem [shape: f32[1,128], index: 2, kind: input, shape index: {}]
  %s3 = inlined_call_operand.vmem [shape: f32[16,128], index: 3, kind: output, shape index: {}]
  %s4 = sld [smem:[#allocation0]]
  $region30: #{forward.1} parent=0
    _
  %s6 = ssub.s32 1, %s4
  %s7 = scalar_select 0, %s6, %s4
  $region1: #{forward.1} parent=0
    #allocation2 [shape = 'u8[65536]{0}', space=vmem, size = 0x10000, scoped, tag = 'input window, operand 1, single buffered']
    #allocation3 [shape = 's32[1]{0}', space=sflag, size = 0x4, scoped, tag = 'scoped memory for forward.1']
    %8 = vsyncpa [#allocation3], 0
    // Predicated region
    $region2: #{forward.1} parent=1 // pred_check
      _
    $region3: #{forward.1} parent=1 // pred_check_branch
      %10 = sbr.rel (0) target = $region5
    $region4: #{forward.1} parent=1 // pred_region
      _
    $region5: #{forward.1} parent=1 // pred_fallthru
      _
    // Predicated region
    $region6: #{forward.1} parent=1 // pred_check
      _
    $region7: #{forward.1} parent=1 // pred_check_branch
      %12 = sbr.rel (0) target = $region9
    $region8: #{forward.1} parent=1 // pred_region
      %s14 = ssub.s32 2048, 2048
      %15 = vsyncadd [#allocation3], %s14
      %s16 = sshll.u32 [#allocation2], 4
      %s17 = int_to_ptr.vmem [resolvable:$true] %s16
      %22 = dma.hbm_to_vmem [thread:$0]  %s1, 2048, %s17, [#allocation3], 128, 128, 8
    $region9: #{forward.1} parent=1 // pred_fallthru
      _
    // Predicated region
    $region10: #{forward.1} parent=1 // pred_check
      _
    $region11: #{forward.1} parent=1 // pred_check_branch
      %24 = sbr.rel (0) target = $region13
    $region12: #{forward.1} parent=1 // pred_region
      _
    $region13: #{forward.1} parent=1 // pred_fallthru
      _
    // Predicated region
    $region14: #{forward.1} parent=1 // pred_check
      _
    $region15: #{forward.1} parent=1 // pred_check_branch
      %26 = sbr.rel (0) target = $region17
    $region16: #{forward.1} parent=1 // pred_region
      %27 = dma.done [#allocation3], 2048
    $region17: #{forward.1} parent=1 // pred_fallthru
      _
    %p28 = scmp.eq.s32.totalorder 0, 0
    // Predicated region
    $region18: #{forward.1} parent=1 // pred_check
      %p29 = pneg %p28
    $region19: #{forward.1} parent=1 // pred_check_branch
      %31 = sbr.rel (%p29) target = $region21
    $region20: #{forward.1} parent=1 // pred_region
      %v32 = vld [vmem:[%s2] sm:$0x1]
      %v34 = vlaneseq
      %v35 = vshrl.u32 %v34, 7
      %v36 = vsub.s32 0, %v35
      %v37 = vrot.slane %v32, %v36
      %39 = vst [vmem:[%s3] sm:$0xff] %v37
      %40 = vst [vmem:[%s3 + $0x8] sm:$0xff] %v37
    $region21: #{forward.1} parent=1 // pred_fallthru
      _
    %v41 = vld [vmem:[%s0] sm:$0xf]
    %v42 = vld [vmem:[%s0 + $0x4] sm:$0xf]
    %v43 = vunpack.c.l.bf16 %v41
    %v44 = vunpack.c.l.bf16 %v42
    %v45 = vld [vmem:[%s3] sm:$0xff]
    %v46 = vld [vmem:[%s3 + $0x8] sm:$0xff]
    %v47 = vld [vmem:[#allocation2] sm:$0xff]
    %v48 = vld [vmem:[#allocation2 + $0x8] sm:$0xff]
    %v49 = vld [vmem:[#allocation2 + $0x10] sm:$0xff]
    %v50 = vld [vmem:[#allocation2 + $0x18] sm:$0xff]
    %v51 = vld [vmem:[#allocation2 + $0x20] sm:$0xff]
    %v52 = vld [vmem:[#allocation2 + $0x28] sm:$0xff]
    %v53 = vld [vmem:[#allocation2 + $0x30] sm:$0xff]
    %v54 = vld [vmem:[#allocation2 + $0x38] sm:$0xff]
    %v55 = vld [vmem:[#allocation2 + $0x40] sm:$0xff]
    %v56 = vld [vmem:[#allocation2 + $0x48] sm:$0xff]
    %v57 = vld [vmem:[#allocation2 + $0x50] sm:$0xff]
    %v58 = vld [vmem:[#allocation2 + $0x58] sm:$0xff]
    %v59 = vld [vmem:[#allocation2 + $0x60] sm:$0xff]
    %v60 = vld [vmem:[#allocation2 + $0x68] sm:$0xff]
    %v61 = vld [vmem:[#allocation2 + $0x70] sm:$0xff]
    %v62 = vld [vmem:[#allocation2 + $0x78] sm:$0xff]
    %63 = vmatprep.subr.mxu0 0.0
    %v64 = vand.u32 %v47, 4294901760
    %65 = vmatpush1.msra.mxu0 %v64
    %66 = vmatprep.subr.mxu0 0.0
    %v67 = vand.u32 %v48, 4294901760
    %68 = vmatpush1.msra.mxu0 %v67
    %69 = vmatprep.subr.mxu0 0.0
    %v70 = vand.u32 %v49, 4294901760
    %71 = vmatpush1.msra.mxu0 %v70
    %72 = vmatprep.subr.mxu0 0.0
    %v73 = vand.u32 %v50, 4294901760
    %74 = vmatpush1.msra.mxu0 %v73
    %75 = vmatprep.subr.mxu0 0.0
    %v76 = vand.u32 %v51, 4294901760
    %77 = vmatpush1.msra.mxu0 %v76
    %78 = vmatprep.subr.mxu0 0.0
    %v79 = vand.u32 %v52, 4294901760
    %80 = vmatpush1.msra.mxu0 %v79
    %81 = vmatprep.subr.mxu0 0.0
    %v82 = vand.u32 %v53, 4294901760
    %83 = vmatpush1.msra.mxu0 %v82
    %84 = vmatprep.subr.mxu0 0.0
    %v85 = vand.u32 %v54, 4294901760
    %86 = vmatpush1.msra.mxu0 %v85
    %87 = vmatprep.subr.mxu0 0.0
    %v88 = vand.u32 %v55, 4294901760
    %89 = vmatpush1.msra.mxu0 %v88
    %90 = vmatprep.subr.mxu0 0.0
    %v91 = vand.u32 %v56, 4294901760
    %92 = vmatpush1.msra.mxu0 %v91
    %93 = vmatprep.subr.mxu0 0.0
    %v94 = vand.u32 %v57, 4294901760
    %95 = vmatpush1.msra.mxu0 %v94
    %96 = vmatprep.subr.mxu0 0.0
    %v97 = vand.u32 %v58, 4294901760
    %98 = vmatpush1.msra.mxu0 %v97
    %99 = vmatprep.subr.mxu0 0.0
    %v100 = vand.u32 %v59, 4294901760
    %101 = vmatpush1.msra.mxu0 %v100
    %102 = vmatprep.subr.mxu0 0.0
    %v103 = vand.u32 %v60, 4294901760
    %104 = vmatpush1.msra.mxu0 %v103
    %105 = vmatprep.subr.mxu0 0.0
    %v106 = vand.u32 %v61, 4294901760
    %107 = vmatpush1.msra.mxu0 %v106
    %108 = vmatprep.subr.mxu0 0.0
    %v109 = vand.u32 %v62, 4294901760
    %110 = vmatpush1.msra.mxu0 %v109
    %111 = vmatprep.subr.mxu0 0.0
    %112 = vmatpush1.msra.mxu0 0.0
    %113 = vmatprep.subr.mxu0 0.0
    %114 = vmatpush1.msra.mxu0 0.0
    %115 = vmatprep.subr.mxu0 0.0
    %116 = vmatpush1.msra.mxu0 0.0
    %117 = vmatprep.subr.mxu0 0.0
    %118 = vmatpush1.msra.mxu0 0.0
    %119 = vmatprep.subr.mxu0 0.0
    %120 = vmatpush1.msra.mxu0 0.0
    %121 = vmatprep.subr.mxu0 0.0
    %122 = vmatpush1.msra.mxu0 0.0
    %123 = vmatprep.subr.mxu0 0.0
    %124 = vmatpush1.msra.mxu0 0.0
    %125 = vmatprep.subr.mxu0 0.0
    %126 = vmatpush1.msra.mxu0 0.0
    %127 = vmatprep.subr.mxu0 0.0
    %128 = vmatpush1.msra.mxu0 0.0
    %129 = vmatprep.subr.mxu0 0.0
    %130 = vmatpush1.msra.mxu0 0.0
    %131 = vmatprep.subr.mxu0 0.0
    %132 = vmatpush1.msra.mxu0 0.0
    %133 = vmatprep.subr.mxu0 0.0
    %134 = vmatpush1.msra.mxu0 0.0
    %135 = vmatprep.subr.mxu0 0.0
    %136 = vmatpush1.msra.mxu0 0.0
    %137 = vmatprep.subr.mxu0 0.0
    %138 = vmatpush1.msra.mxu0 0.0
    %139 = vmatprep.subr.mxu0 0.0
    %140 = vmatpush1.msra.mxu0 0.0
    %141 = vmatprep.subr.mxu0 0.0
    %142 = vmatpush1.msra.mxu0 0.0
    %143 = vmatprep.mubr.f32.mxu0 0.0
    %v144 = vsub.f32 %v43, %v43
    %v145 = vand.u32 %v144, 4294901760
    %v146 = vsub.f32 %v144, %v145
    %v147 = vand.u32 %v146, 4294901760
    %148 = vmatmul.mubr.f32.gmra.mrb[0].mxu0 %v147
    %v149 = vpop.f32.mrb[0].mxu0
    %v150 = vadd.f32 0.0, %v149
    %v151 = vpop.f32.mrb[0].mxu0
    %152 = vmatprep.mubr.f32.mxu0 0.0
    %v153 = vsub.f32 %v44, %v44
    %v154 = vand.u32 %v153, 4294901760
    %v155 = vsub.f32 %v153, %v154
    %v156 = vand.u32 %v155, 4294901760
    %157 = vmatmul.mubr.f32.gmra.mrb[0].mxu0 %v156
    %v158 = vpop.f32.mrb[0].mxu0
    %v159 = vadd.f32 0.0, %v158
    %v160 = vpop.f32.mrb[0].mxu0
    %161 = vdwg.mxu0
    %162 = vmatprep.subr.mxu0 0.0
    %v163 = vand.u32 %v47, 4294901760
    %v164 = vsub.f32 %v47, %v163
    %v165 = vand.u32 %v164, 4294901760
    %v166 = vsub.f32 %v164, %v165
    %v167 = vand.u32 %v166, 4294901760
    %168 = vmatpush1.msra.mxu0 %v167
    %169 = vmatprep.subr.mxu0 0.0
    %v170 = vand.u32 %v48, 4294901760
    %v171 = vsub.f32 %v48, %v170
    %v172 = vand.u32 %v171, 4294901760
    %v173 = vsub.f32 %v171, %v172
    %v174 = vand.u32 %v173, 4294901760
    %175 = vmatpush1.msra.mxu0 %v174
    %176 = vmatprep.subr.mxu0 0.0
    %v177 = vand.u32 %v49, 4294901760
    %v178 = vsub.f32 %v49, %v177
    %v179 = vand.u32 %v178, 4294901760
    %v180 = vsub.f32 %v178, %v179
    %v181 = vand.u32 %v180, 4294901760
    %182 = vmatpush1.msra.mxu0 %v181
    %183 = vmatprep.subr.mxu0 0.0
    %v184 = vand.u32 %v50, 4294901760
    %v185 = vsub.f32 %v50, %v184
    %v186 = vand.u32 %v185, 4294901760
    %v187 = vsub.f32 %v185, %v186
    %v188 = vand.u32 %v187, 4294901760
    %189 = vmatpush1.msra.mxu0 %v188
    %190 = vmatprep.subr.mxu0 0.0
    %v191 = vand.u32 %v51, 4294901760
    %v192 = vsub.f32 %v51, %v191
    %v193 = vand.u32 %v192, 4294901760
    %v194 = vsub.f32 %v192, %v193
    %v195 = vand.u32 %v194, 4294901760
    %196 = vmatpush1.msra.mxu0 %v195
    %197 = vmatprep.subr.mxu0 0.0
    %v198 = vand.u32 %v52, 4294901760
    %v199 = vsub.f32 %v52, %v198
    %v200 = vand.u32 %v199, 4294901760
    %v201 = vsub.f32 %v199, %v200
    %v202 = vand.u32 %v201, 4294901760
    %203 = vmatpush1.msra.mxu0 %v202
    %204 = vmatprep.subr.mxu0 0.0
    %v205 = vand.u32 %v53, 4294901760
    %v206 = vsub.f32 %v53, %v205
    %v207 = vand.u32 %v206, 4294901760
    %v208 = vsub.f32 %v206, %v207
    %v209 = vand.u32 %v208, 4294901760
    %210 = vmatpush1.msra.mxu0 %v209
    %211 = vmatprep.subr.mxu0 0.0
    %v212 = vand.u32 %v54, 4294901760
    %v213 = vsub.f32 %v54, %v212
    %v214 = vand.u32 %v213, 4294901760
    %v215 = vsub.f32 %v213, %v214
    %v216 = vand.u32 %v215, 4294901760
    %217 = vmatpush1.msra.mxu0 %v216
    %218 = vmatprep.subr.mxu0 0.0
    %v219 = vand.u32 %v55, 4294901760
    %v220 = vsub.f32 %v55, %v219
    %v221 = vand.u32 %v220, 4294901760
    %v222 = vsub.f32 %v220, %v221
    %v223 = vand.u32 %v222, 4294901760
    %224 = vmatpush1.msra.mxu0 %v223
    %225 = vmatprep.subr.mxu0 0.0
    %v226 = vand.u32 %v56, 4294901760
    %v227 = vsub.f32 %v56, %v226
    %v228 = vand.u32 %v227, 4294901760
    %v229 = vsub.f32 %v227, %v228
    %v230 = vand.u32 %v229, 4294901760
    %231 = vmatpush1.msra.mxu0 %v230
    %232 = vmatprep.subr.mxu0 0.0
    %v233 = vand.u32 %v57, 4294901760
    %v234 = vsub.f32 %v57, %v233
    %v235 = vand.u32 %v234, 4294901760
    %v236 = vsub.f32 %v234, %v235
    %v237 = vand.u32 %v236, 4294901760
    %238 = vmatpush1.msra.mxu0 %v237
    %239 = vmatprep.subr.mxu0 0.0
    %v240 = vand.u32 %v58, 4294901760
    %v241 = vsub.f32 %v58, %v240
    %v242 = vand.u32 %v241, 4294901760
    %v243 = vsub.f32 %v241, %v242
    %v244 = vand.u32 %v243, 4294901760
    %245 = vmatpush1.msra.mxu0 %v244
    %246 = vmatprep.subr.mxu0 0.0
    %v247 = vand.u32 %v59, 4294901760
    %v248 = vsub.f32 %v59, %v247
    %v249 = vand.u32 %v248, 4294901760
    %v250 = vsub.f32 %v248, %v249
    %v251 = vand.u32 %v250, 4294901760
    %252 = vmatpush1.msra.mxu0 %v251
    %253 = vmatprep.subr.mxu0 0.0
    %v254 = vand.u32 %v60, 4294901760
    %v255 = vsub.f32 %v60, %v254
    %v256 = vand.u32 %v255, 4294901760
    %v257 = vsub.f32 %v255, %v256
    %v258 = vand.u32 %v257, 4294901760
    %259 = vmatpush1.msra.mxu0 %v258
    %260 = vmatprep.subr.mxu0 0.0
    %v261 = vand.u32 %v61, 4294901760
    %v262 = vsub.f32 %v61, %v261
    %v263 = vand.u32 %v262, 4294901760
    %v264 = vsub.f32 %v262, %v263
    %v265 = vand.u32 %v264, 4294901760
    %266 = vmatpush1.msra.mxu0 %v265
    %267 = vmatprep.subr.mxu0 0.0
    %v268 = vand.u32 %v62, 4294901760
    %v269 = vsub.f32 %v62, %v268
    %v270 = vand.u32 %v269, 4294901760
    %v271 = vsub.f32 %v269, %v270
    %v272 = vand.u32 %v271, 4294901760
    %273 = vmatpush1.msra.mxu0 %v272
    %274 = vmatprep.subr.mxu0 0.0
    %275 = vmatpush1.msra.mxu0 0.0
    %276 = vmatprep.subr.mxu0 0.0
    %277 = vmatpush1.msra.mxu0 0.0
    %278 = vmatprep.subr.mxu0 0.0
    %279 = vmatpush1.msra.mxu0 0.0
    %280 = vmatprep.subr.mxu0 0.0
    %281 = vmatpush1.msra.mxu0 0.0
    %282 = vmatprep.subr.mxu0 0.0
    %283 = vmatpush1.msra.mxu0 0.0
    %284 = vmatprep.subr.mxu0 0.0
    %285 = vmatpush1.msra.mxu0 0.0
    %286 = vmatprep.subr.mxu0 0.0
    %287 = vmatpush1.msra.mxu0 0.0
    %288 = vmatprep.subr.mxu0 0.0
    %289 = vmatpush1.msra.mxu0 0.0
    %290 = vmatprep.subr.mxu0 0.0
    %291 = vmatpush1.msra.mxu0 0.0
    %292 = vmatprep.subr.mxu0 0.0
    %293 = vmatpush1.msra.mxu0 0.0
    %294 = vmatprep.subr.mxu0 0.0
    %295 = vmatpush1.msra.mxu0 0.0
    %296 = vmatprep.subr.mxu0 0.0
    %297 = vmatpush1.msra.mxu0 0.0
    %298 = vmatprep.subr.mxu0 0.0
    %299 = vmatpush1.msra.mxu0 0.0
    %300 = vmatprep.subr.mxu0 0.0
    %301 = vmatpush1.msra.mxu0 0.0
    %302 = vmatprep.subr.mxu0 0.0
    %303 = vmatpush1.msra.mxu0 0.0
    %304 = vmatprep.subr.mxu0 0.0
    %305 = vmatpush1.msra.mxu0 0.0
    %306 = vmatprep.mubr.f32.mxu0 0.0
    %307 = vmatmul.mubr.f32.gmra.mrb[0].mxu0 %v43
    %v308 = vpop.f32.mrb[0].mxu0
    %v309 = vadd.f32 %v150, %v308
    %v310 = vpop.f32.mrb[0].mxu0
    %311 = vmatprep.mubr.f32.mxu0 0.0
    %312 = vmatmul.mubr.f32.gmra.mrb[0].mxu0 %v44
    %v313 = vpop.f32.mrb[0].mxu0
    %v314 = vadd.f32 %v159, %v313
    %v315 = vpop.f32.mrb[0].mxu0
    %316 = vdwg.mxu0
    %317 = vmatprep.subr.mxu0 0.0
    %v318 = vand.u32 %v47, 4294901760
    %v319 = vsub.f32 %v47, %v318
    %320 = vmatpush1.msra.mxu0 %v319
    %321 = vmatprep.subr.mxu0 0.0
    %v322 = vand.u32 %v48, 4294901760
    %v323 = vsub.f32 %v48, %v322
    %324 = vmatpush1.msra.mxu0 %v323
    %325 = vmatprep.subr.mxu0 0.0
    %v326 = vand.u32 %v49, 4294901760
    %v327 = vsub.f32 %v49, %v326
    %328 = vmatpush1.msra.mxu0 %v327
    %329 = vmatprep.subr.mxu0 0.0
    %v330 = vand.u32 %v50, 4294901760
    %v331 = vsub.f32 %v50, %v330
    %332 = vmatpush1.msra.mxu0 %v331
    %333 = vmatprep.subr.mxu0 0.0
    %v334 = vand.u32 %v51, 4294901760
    %v335 = vsub.f32 %v51, %v334
    %336 = vmatpush1.msra.mxu0 %v335
    %337 = vmatprep.subr.mxu0 0.0
    %v338 = vand.u32 %v52, 4294901760
    %v339 = vsub.f32 %v52, %v338
    %340 = vmatpush1.msra.mxu0 %v339
    %341 = vmatprep.subr.mxu0 0.0
    %v342 = vand.u32 %v53, 4294901760
    %v343 = vsub.f32 %v53, %v342
    %344 = vmatpush1.msra.mxu0 %v343
    %345 = vmatprep.subr.mxu0 0.0
    %v346 = vand.u32 %v54, 4294901760
    %v347 = vsub.f32 %v54, %v346
    %348 = vmatpush1.msra.mxu0 %v347
    %349 = vmatprep.subr.mxu0 0.0
    %v350 = vand.u32 %v55, 4294901760
    %v351 = vsub.f32 %v55, %v350
    %352 = vmatpush1.msra.mxu0 %v351
    %353 = vmatprep.subr.mxu0 0.0
    %v354 = vand.u32 %v56, 4294901760
    %v355 = vsub.f32 %v56, %v354
    %356 = vmatpush1.msra.mxu0 %v355
    %357 = vmatprep.subr.mxu0 0.0
    %v358 = vand.u32 %v57, 4294901760
    %v359 = vsub.f32 %v57, %v358
    %360 = vmatpush1.msra.mxu0 %v359
    %361 = vmatprep.subr.mxu0 0.0
    %v362 = vand.u32 %v58, 4294901760
    %v363 = vsub.f32 %v58, %v362
    %364 = vmatpush1.msra.mxu0 %v363
    %365 = vmatprep.subr.mxu0 0.0
    %v366 = vand.u32 %v59, 4294901760
    %v367 = vsub.f32 %v59, %v366
    %368 = vmatpush1.msra.mxu0 %v367
    %369 = vmatprep.subr.mxu0 0.0
    %v370 = vand.u32 %v60, 4294901760
    %v371 = vsub.f32 %v60, %v370
    %372 = vmatpush1.msra.mxu0 %v371
    %373 = vmatprep.subr.mxu0 0.0
    %v374 = vand.u32 %v61, 4294901760
    %v375 = vsub.f32 %v61, %v374
    %376 = vmatpush1.msra.mxu0 %v375
    %377 = vmatprep.subr.mxu0 0.0
    %v378 = vand.u32 %v62, 4294901760
    %v379 = vsub.f32 %v62, %v378
    %380 = vmatpush1.msra.mxu0 %v379
    %381 = vmatprep.subr.mxu0 0.0
    %382 = vmatpush1.msra.mxu0 0.0
    %383 = vmatprep.subr.mxu0 0.0
    %384 = vmatpush1.msra.mxu0 0.0
    %385 = vmatprep.subr.mxu0 0.0
    %386 = vmatpush1.msra.mxu0 0.0
    %387 = vmatprep.subr.mxu0 0.0
    %388 = vmatpush1.msra.mxu0 0.0
    %389 = vmatprep.subr.mxu0 0.0
    %390 = vmatpush1.msra.mxu0 0.0
    %391 = vmatprep.subr.mxu0 0.0
    %392 = vmatpush1.msra.mxu0 0.0
    %393 = vmatprep.subr.mxu0 0.0
    %394 = vmatpush1.msra.mxu0 0.0
    %395 = vmatprep.subr.mxu0 0.0
    %396 = vmatpush1.msra.mxu0 0.0
    %397 = vmatprep.subr.mxu0 0.0
    %398 = vmatpush1.msra.mxu0 0.0
    %399 = vmatprep.subr.mxu0 0.0
    %400 = vmatpush1.msra.mxu0 0.0
    %401 = vmatprep.subr.mxu0 0.0
    %402 = vmatpush1.msra.mxu0 0.0
    %403 = vmatprep.subr.mxu0 0.0
    %404 = vmatpush1.msra.mxu0 0.0
    %405 = vmatprep.subr.mxu0 0.0
    %406 = vmatpush1.msra.mxu0 0.0
    %407 = vmatprep.subr.mxu0 0.0
    %408 = vmatpush1.msra.mxu0 0.0
    %409 = vmatprep.subr.mxu0 0.0
    %410 = vmatpush1.msra.mxu0 0.0
    %411 = vmatprep.subr.mxu0 0.0
    %412 = vmatpush1.msra.mxu0 0.0
    %413 = vmatprep.mubr.f32.mxu0 0.0
    %v414 = vsub.f32 %v43, %v43
    %415 = vmatmul.mubr.f32.gmra.mrb[0].mxu0 %v414
    %v416 = vpop.f32.mrb[0].mxu0
    %v417 = vadd.f32 %v309, %v416
    %v418 = vpop.f32.mrb[0].mxu0
    %419 = vmatprep.mubr.f32.mxu0 0.0
    %v420 = vsub.f32 %v44, %v44
    %421 = vmatmul.mubr.f32.gmra.mrb[0].mxu0 %v420
    %v422 = vpop.f32.mrb[0].mxu0
    %v423 = vadd.f32 %v314, %v422
    %v424 = vpop.f32.mrb[0].mxu0
    %425 = vdwg.mxu0
    %426 = vmatprep.subr.mxu0 0.0
    %v427 = vand.u32 %v47, 4294901760
    %428 = vmatpush1.msra.mxu0 %v427
    %429 = vmatprep.subr.mxu0 0.0
    %v430 = vand.u32 %v48, 4294901760
    %431 = vmatpush1.msra.mxu0 %v430
    %432 = vmatprep.subr.mxu0 0.0
    %v433 = vand.u32 %v49, 4294901760
    %434 = vmatpush1.msra.mxu0 %v433
    %435 = vmatprep.subr.mxu0 0.0
    %v436 = vand.u32 %v50, 4294901760
    %437 = vmatpush1.msra.mxu0 %v436
    %438 = vmatprep.subr.mxu0 0.0
    %v439 = vand.u32 %v51, 4294901760
    %440 = vmatpush1.msra.mxu0 %v439
    %441 = vmatprep.subr.mxu0 0.0
    %v442 = vand.u32 %v52, 4294901760
    %443 = vmatpush1.msra.mxu0 %v442
    %444 = vmatprep.subr.mxu0 0.0
    %v445 = vand.u32 %v53, 4294901760
    %446 = vmatpush1.msra.mxu0 %v445
    %447 = vmatprep.subr.mxu0 0.0
    %v448 = vand.u32 %v54, 4294901760
    %449 = vmatpush1.msra.mxu0 %v448
    %450 = vmatprep.subr.mxu0 0.0
    %v451 = vand.u32 %v55, 4294901760
    %452 = vmatpush1.msra.mxu0 %v451
    %453 = vmatprep.subr.mxu0 0.0
    %v454 = vand.u32 %v56, 4294901760
    %455 = vmatpush1.msra.mxu0 %v454
    %456 = vmatprep.subr.mxu0 0.0
    %v457 = vand.u32 %v57, 4294901760
    %458 = vmatpush1.msra.mxu0 %v457
    %459 = vmatprep.subr.mxu0 0.0
    %v460 = vand.u32 %v58, 4294901760
    %461 = vmatpush1.msra.mxu0 %v460
    %462 = vmatprep.subr.mxu0 0.0
    %v463 = vand.u32 %v59, 4294901760
    %464 = vmatpush1.msra.mxu0 %v463
    %465 = vmatprep.subr.mxu0 0.0
    %v466 = vand.u32 %v60, 4294901760
    %467 = vmatpush1.msra.mxu0 %v466
    %468 = vmatprep.subr.mxu0 0.0
    %v469 = vand.u32 %v61, 4294901760
    %470 = vmatpush1.msra.mxu0 %v469
    %471 = vmatprep.subr.mxu0 0.0
    %v472 = vand.u32 %v62, 4294901760
    %473 = vmatpush1.msra.mxu0 %v472
    %474 = vmatprep.subr.mxu0 0.0
    %475 = vmatpush1.msra.mxu0 0.0
    %476 = vmatprep.subr.mxu0 0.0
    %477 = vmatpush1.msra.mxu0 0.0
    %478 = vmatprep.subr.mxu0 0.0
    %479 = vmatpush1.msra.mxu0 0.0
    %480 = vmatprep.subr.mxu0 0.0
    %481 = vmatpush1.msra.mxu0 0.0
    %482 = vmatprep.subr.mxu0 0.0
    %483 = vmatpush1.msra.mxu0 0.0
    %484 = vmatprep.subr.mxu0 0.0
    %485 = vmatpush1.msra.mxu0 0.0
    %486 = vmatprep.subr.mxu0 0.0
    %487 = vmatpush1.msra.mxu0 0.0
    %488 = vmatprep.subr.mxu0 0.0
    %489 = vmatpush1.msra.mxu0 0.0
    %490 = vmatprep.subr.mxu0 0.0
    %491 = vmatpush1.msra.mxu0 0.0
    %492 = vmatprep.subr.mxu0 0.0
    %493 = vmatpush1.msra.mxu0 0.0
    %494 = vmatprep.subr.mxu0 0.0
    %495 = vmatpush1.msra.mxu0 0.0
    %496 = vmatprep.subr.mxu0 0.0
    %497 = vmatpush1.msra.mxu0 0.0
    %498 = vmatprep.subr.mxu0 0.0
    %499 = vmatpush1.msra.mxu0 0.0
    %500 = vmatprep.subr.mxu0 0.0
    %501 = vmatpush1.msra.mxu0 0.0
    %502 = vmatprep.subr.mxu0 0.0
    %503 = vmatpush1.msra.mxu0 0.0
    %504 = vmatprep.subr.mxu0 0.0
    %505 = vmatpush1.msra.mxu0 0.0
    %506 = vmatprep.mubr.f32.mxu0 0.0
    %v507 = vsub.f32 %v43, %v43
    %v508 = vand.u32 %v507, 4294901760
    %509 = vmatmul.mubr.f32.gmra.mrb[0].mxu0 %v508
    %v510 = vpop.f32.mrb[0].mxu0
    %v511 = vadd.f32 %v417, %v510
    %v512 = vpop.f32.mrb[0].mxu0
    %513 = vmatprep.mubr.f32.mxu0 0.0
    %v514 = vsub.f32 %v44, %v44
    %v515 = vand.u32 %v514, 4294901760
    %516 = vmatmul.mubr.f32.gmra.mrb[0].mxu0 %v515
    %v517 = vpop.f32.mrb[0].mxu0
    %v518 = vadd.f32 %v423, %v517
    %v519 = vpop.f32.mrb[0].mxu0
    %520 = vdwg.mxu0
    %521 = vmatprep.subr.mxu0 0.0
    %v522 = vand.u32 %v47, 4294901760
    %v523 = vsub.f32 %v47, %v522
    %v524 = vand.u32 %v523, 4294901760
    %525 = vmatpush1.msra.mxu0 %v524
    %526 = vmatprep.subr.mxu0 0.0
    %v527 = vand.u32 %v48, 4294901760
    %v528 = vsub.f32 %v48, %v527
    %v529 = vand.u32 %v528, 4294901760
    %530 = vmatpush1.msra.mxu0 %v529
    %531 = vmatprep.subr.mxu0 0.0
    %v532 = vand.u32 %v49, 4294901760
    %v533 = vsub.f32 %v49, %v532
    %v534 = vand.u32 %v533, 4294901760
    %535 = vmatpush1.msra.mxu0 %v534
    %536 = vmatprep.subr.mxu0 0.0
    %v537 = vand.u32 %v50, 4294901760
    %v538 = vsub.f32 %v50, %v537
    %v539 = vand.u32 %v538, 4294901760
    %540 = vmatpush1.msra.mxu0 %v539
    %541 = vmatprep.subr.mxu0 0.0
    %v542 = vand.u32 %v51, 4294901760
    %v543 = vsub.f32 %v51, %v542
    %v544 = vand.u32 %v543, 4294901760
    %545 = vmatpush1.msra.mxu0 %v544
    %546 = vmatprep.subr.mxu0 0.0
    %v547 = vand.u32 %v52, 4294901760
    %v548 = vsub.f32 %v52, %v547
    %v549 = vand.u32 %v548, 4294901760
    %550 = vmatpush1.msra.mxu0 %v549
    %551 = vmatprep.subr.mxu0 0.0
    %v552 = vand.u32 %v53, 4294901760
    %v553 = vsub.f32 %v53, %v552
    %v554 = vand.u32 %v553, 4294901760
    %555 = vmatpush1.msra.mxu0 %v554
    %556 = vmatprep.subr.mxu0 0.0
    %v557 = vand.u32 %v54, 4294901760
    %v558 = vsub.f32 %v54, %v557
    %v559 = vand.u32 %v558, 4294901760
    %560 = vmatpush1.msra.mxu0 %v559
    %561 = vmatprep.subr.mxu0 0.0
    %v562 = vand.u32 %v55, 4294901760
    %v563 = vsub.f32 %v55, %v562
    %v564 = vand.u32 %v563, 4294901760
    %565 = vmatpush1.msra.mxu0 %v564
    %566 = vmatprep.subr.mxu0 0.0
    %v567 = vand.u32 %v56, 4294901760
    %v568 = vsub.f32 %v56, %v567
    %v569 = vand.u32 %v568, 4294901760
    %570 = vmatpush1.msra.mxu0 %v569
    %571 = vmatprep.subr.mxu0 0.0
    %v572 = vand.u32 %v57, 4294901760
    %v573 = vsub.f32 %v57, %v572
    %v574 = vand.u32 %v573, 4294901760
    %575 = vmatpush1.msra.mxu0 %v574
    %576 = vmatprep.subr.mxu0 0.0
    %v577 = vand.u32 %v58, 4294901760
    %v578 = vsub.f32 %v58, %v577
    %v579 = vand.u32 %v578, 4294901760
    %580 = vmatpush1.msra.mxu0 %v579
    %581 = vmatprep.subr.mxu0 0.0
    %v582 = vand.u32 %v59, 4294901760
    %v583 = vsub.f32 %v59, %v582
    %v584 = vand.u32 %v583, 4294901760
    %585 = vmatpush1.msra.mxu0 %v584
    %586 = vmatprep.subr.mxu0 0.0
    %v587 = vand.u32 %v60, 4294901760
    %v588 = vsub.f32 %v60, %v587
    %v589 = vand.u32 %v588, 4294901760
    %590 = vmatpush1.msra.mxu0 %v589
    %591 = vmatprep.subr.mxu0 0.0
    %v592 = vand.u32 %v61, 4294901760
    %v593 = vsub.f32 %v61, %v592
    %v594 = vand.u32 %v593, 4294901760
    %595 = vmatpush1.msra.mxu0 %v594
    %596 = vmatprep.subr.mxu0 0.0
    %v597 = vand.u32 %v62, 4294901760
    %v598 = vsub.f32 %v62, %v597
    %v599 = vand.u32 %v598, 4294901760
    %600 = vmatpush1.msra.mxu0 %v599
    %601 = vmatprep.subr.mxu0 0.0
    %602 = vmatpush1.msra.mxu0 0.0
    %603 = vmatprep.subr.mxu0 0.0
    %604 = vmatpush1.msra.mxu0 0.0
    %605 = vmatprep.subr.mxu0 0.0
    %606 = vmatpush1.msra.mxu0 0.0
    %607 = vmatprep.subr.mxu0 0.0
    %608 = vmatpush1.msra.mxu0 0.0
    %609 = vmatprep.subr.mxu0 0.0
    %610 = vmatpush1.msra.mxu0 0.0
    %611 = vmatprep.subr.mxu0 0.0
    %612 = vmatpush1.msra.mxu0 0.0
    %613 = vmatprep.subr.mxu0 0.0
    %614 = vmatpush1.msra.mxu0 0.0
    %615 = vmatprep.subr.mxu0 0.0
    %616 = vmatpush1.msra.mxu0 0.0
    %617 = vmatprep.subr.mxu0 0.0
    %618 = vmatpush1.msra.mxu0 0.0
    %619 = vmatprep.subr.mxu0 0.0
    %620 = vmatpush1.msra.mxu0 0.0
    %621 = vmatprep.subr.mxu0 0.0
    %622 = vmatpush1.msra.mxu0 0.0
    %623 = vmatprep.subr.mxu0 0.0
    %624 = vmatpush1.msra.mxu0 0.0
    %625 = vmatprep.subr.mxu0 0.0
    %626 = vmatpush1.msra.mxu0 0.0
    %627 = vmatprep.subr.mxu0 0.0
    %628 = vmatpush1.msra.mxu0 0.0
    %629 = vmatprep.subr.mxu0 0.0
    %630 = vmatpush1.msra.mxu0 0.0
    %631 = vmatprep.subr.mxu0 0.0
    %632 = vmatpush1.msra.mxu0 0.0
    %633 = vmatprep.mubr.f32.mxu0 0.0
    %634 = vmatmul.mubr.f32.gmra.mrb[0].mxu0 %v43
    %v635 = vpop.f32.mrb[0].mxu0
    %v636 = vadd.f32 %v511, %v635
    %v637 = vpop.f32.mrb[0].mxu0
    %638 = vmatprep.mubr.f32.mxu0 0.0
    %639 = vmatmul.mubr.f32.gmra.mrb[0].mxu0 %v44
    %v640 = vpop.f32.mrb[0].mxu0
    %v641 = vadd.f32 %v518, %v640
    %v642 = vpop.f32.mrb[0].mxu0
    %643 = vdwg.mxu0
    %644 = vmatprep.subr.mxu0 0.0
    %v645 = vand.u32 %v47, 4294901760
    %646 = vmatpush1.msra.mxu0 %v645
    %647 = vmatprep.subr.mxu0 0.0
    %v648 = vand.u32 %v48, 4294901760
    %649 = vmatpush1.msra.mxu0 %v648
    %650 = vmatprep.subr.mxu0 0.0
    %v651 = vand.u32 %v49, 4294901760
    %652 = vmatpush1.msra.mxu0 %v651
    %653 = vmatprep.subr.mxu0 0.0
    %v654 = vand.u32 %v50, 4294901760
    %655 = vmatpush1.msra.mxu0 %v654
    %656 = vmatprep.subr.mxu0 0.0
    %v657 = vand.u32 %v51, 4294901760
    %658 = vmatpush1.msra.mxu0 %v657
    %659 = vmatprep.subr.mxu0 0.0
    %v660 = vand.u32 %v52, 4294901760
    %661 = vmatpush1.msra.mxu0 %v660
    %662 = vmatprep.subr.mxu0 0.0
    %v663 = vand.u32 %v53, 4294901760
    %664 = vmatpush1.msra.mxu0 %v663
    %665 = vmatprep.subr.mxu0 0.0
    %v666 = vand.u32 %v54, 4294901760
    %667 = vmatpush1.msra.mxu0 %v666
    %668 = vmatprep.subr.mxu0 0.0
    %v669 = vand.u32 %v55, 4294901760
    %670 = vmatpush1.msra.mxu0 %v669
    %671 = vmatprep.subr.mxu0 0.0
    %v672 = vand.u32 %v56, 4294901760
    %673 = vmatpush1.msra.mxu0 %v672
    %674 = vmatprep.subr.mxu0 0.0
    %v675 = vand.u32 %v57, 4294901760
    %676 = vmatpush1.msra.mxu0 %v675
    %677 = vmatprep.subr.mxu0 0.0
    %v678 = vand.u32 %v58, 4294901760
    %679 = vmatpush1.msra.mxu0 %v678
    %680 = vmatprep.subr.mxu0 0.0
    %v681 = vand.u32 %v59, 4294901760
    %682 = vmatpush1.msra.mxu0 %v681
    %683 = vmatprep.subr.mxu0 0.0
    %v684 = vand.u32 %v60, 4294901760
    %685 = vmatpush1.msra.mxu0 %v684
    %686 = vmatprep.subr.mxu0 0.0
    %v687 = vand.u32 %v61, 4294901760
    %688 = vmatpush1.msra.mxu0 %v687
    %689 = vmatprep.subr.mxu0 0.0
    %v690 = vand.u32 %v62, 4294901760
    %691 = vmatpush1.msra.mxu0 %v690
    %692 = vmatprep.subr.mxu0 0.0
    %693 = vmatpush1.msra.mxu0 0.0
    %694 = vmatprep.subr.mxu0 0.0
    %695 = vmatpush1.msra.mxu0 0.0
    %696 = vmatprep.subr.mxu0 0.0
    %697 = vmatpush1.msra.mxu0 0.0
    %698 = vmatprep.subr.mxu0 0.0
    %699 = vmatpush1.msra.mxu0 0.0
    %700 = vmatprep.subr.mxu0 0.0
    %701 = vmatpush1.msra.mxu0 0.0
    %702 = vmatprep.subr.mxu0 0.0
    %703 = vmatpush1.msra.mxu0 0.0
    %704 = vmatprep.subr.mxu0 0.0
    %705 = vmatpush1.msra.mxu0 0.0
    %706 = vmatprep.subr.mxu0 0.0
    %707 = vmatpush1.msra.mxu0 0.0
    %708 = vmatprep.subr.mxu0 0.0
    %709 = vmatpush1.msra.mxu0 0.0
    %710 = vmatprep.subr.mxu0 0.0
    %711 = vmatpush1.msra.mxu0 0.0
    %712 = vmatprep.subr.mxu0 0.0
    %713 = vmatpush1.msra.mxu0 0.0
    %714 = vmatprep.subr.mxu0 0.0
    %715 = vmatpush1.msra.mxu0 0.0
    %716 = vmatprep.subr.mxu0 0.0
    %717 = vmatpush1.msra.mxu0 0.0
    %718 = vmatprep.subr.mxu0 0.0
    %719 = vmatpush1.msra.mxu0 0.0
    %720 = vmatprep.subr.mxu0 0.0
    %721 = vmatpush1.msra.mxu0 0.0
    %722 = vmatprep.subr.mxu0 0.0
    %723 = vmatpush1.msra.mxu0 0.0
    %724 = vmatprep.mubr.f32.mxu0 0.0
    %725 = vmatmul.mubr.f32.gmra.mrb[0].mxu0 %v43
    %v726 = vpop.f32.mrb[0].mxu0
    %v727 = vadd.f32 %v636, %v726
    %v728 = vpop.f32.mrb[0].mxu0
    %729 = vmatprep.mubr.f32.mxu0 0.0
    %730 = vmatmul.mubr.f32.gmra.mrb[0].mxu0 %v44
    %v731 = vpop.f32.mrb[0].mxu0
    %v732 = vadd.f32 %v641, %v731
    %v733 = vpop.f32.mrb[0].mxu0
    %734 = vdwg.mxu0
    %v735 = vadd.f32 %v45, %v727
    %v736 = vadd.f32 %v46, %v732
    %737 = vst [vmem:[%s3] sm:$0xff] %v735
    %738 = vst [vmem:[%s3 + $0x8] sm:$0xff] %v736
    // Predicated region
    $region22: #{forward.1} parent=1 // pred_check
      _
    $region23: #{forward.1} parent=1 // pred_check_branch
      %740 = sbr.rel (0) target = $region25
    $region24: #{forward.1} parent=1 // pred_region
      _
    $region25: #{forward.1} parent=1 // pred_fallthru
      _
    // Predicated region
    $region26: #{forward.1} parent=1 // pred_check
      _
    $region27: #{forward.1} parent=1 // pred_check_branch
      %742 = sbr.rel (0) target = $region29
    $region28: #{forward.1} parent=1 // pred_region
      _
    $region29: #{forward.1} parent=1 // pred_fallthru
      _
    %743 = vsyncpa [#allocation3], 1

</llo_original>
